<compile_context>
chip_gen: v6e
topology: v6e:2x2x1
jax: 0.10.0
libtpu: 0.0.40
codegen_flags: <defaults>
</compile_context>

<pallas_src>
import jax
import jax.numpy as jnp
import numpy as np
from jax.experimental import pallas as pl
from jax.experimental.pallas import tpu as pltpu

D_IN, D_H1, D_H2, D_OUT = 4, 24, 64, 1


def _pgn_kernel(xT_ref, w1_ref, b1_ref, w2_ref, b2_ref, w3_ref, b3_ref, o_ref):
    xT = xT_ref[...]                                                    # (4, TB)

    # fc1 + ReLU : (24, 4) @ (4, TB) -> (24, TB)   (MXU, f32 accumulate)
    h1 = jnp.dot(w1_ref[...], xT, preferred_element_type=jnp.float32) + b1_ref[...]
    h1 = jnp.maximum(h1, 0.0)

    # fc2 + ReLU : (64, 24) @ (24, TB) -> (64, TB) (MXU, f32 accumulate)
    h2 = jnp.dot(w2_ref[...], h1, preferred_element_type=jnp.float32) + b2_ref[...]
    h2 = jnp.maximum(h2, 0.0)

    # fc3 as a VPU multiply + sublane reduce — keeps the N=1 product off the MXU.
    h3 = jnp.sum(h2 * w3_ref[...], axis=0, keepdims=True) + b3_ref[...]  # (1, TB)

    # Sigmoid (exp + reciprocal) on the EUP.
    o_ref[...] = jax.nn.sigmoid(h3)


def _round_up(n, m):
    return ((n + m - 1) // m) * m


def pgn_forward(x, params, *, tile_b=512):
    """x: (B, 4) float32.  params: torch-layout (out,in) weights, column biases."""
    B = x.shape[0]
    w1, b1, w2, b2, w3, b3 = (params[k] for k in ("w1", "b1", "w2", "b2", "w3", "b3"))

    # Batch tile: a multiple of 128 lanes, capped at tile_b; pad B up to it.
    TB = min(tile_b, _round_up(B, 128))
    B_pad = _round_up(B, TB)
    grid = (B_pad // TB,)

    # Feature-major layout so batch rides the 128-lane axis (lane-dense output).
    x_pad = jnp.pad(x.astype(jnp.float32), ((0, B_pad - B), (0, 0)))
    xT = x_pad.T                                                        # (4, B_pad)

    resident = lambda shp: pl.BlockSpec(shp, lambda i: (0, 0))          # grid-invariant
    in_specs = [
        pl.BlockSpec((D_IN, TB), lambda i: (0, i)),                     # x tile streams
        resident(w1.shape), resident(b1.shape),
        resident(w2.shape), resident(b2.shape),
        resident(w3.shape), resident(b3.shape),
    ]
    out_spec = pl.BlockSpec((D_OUT, TB), lambda i: (0, i))

    weight_bytes = sum(int(np.prod(p.shape)) * 4 for p in (w1, b1, w2, b2, w3, b3))
    cost = pl.CostEstimate(
        flops=2 * B_pad * (D_IN * D_H1 + D_H1 * D_H2 + D_H2 * D_OUT),
        transcendentals=B_pad,
        bytes_accessed=B_pad * (D_IN + D_OUT) * 4 + weight_bytes,
    )

    out = pl.pallas_call(
        _pgn_kernel,
        out_shape=jax.ShapeDtypeStruct((D_OUT, B_pad), jnp.float32),
        grid=grid,
        in_specs=in_specs,
        out_specs=out_spec,
        compiler_params=pltpu.CompilerParams(
            dimension_semantics=("parallel",)),     # v7x: 2-TC megacore sharding
        cost_estimate=cost,
    )(xT, w1, b1, w2, b2, w3, b3)

    # (1, B_pad) lane-dense slab -> (B, 1), matching the torch module's output.
    return out[0, :B].reshape(B, 1)


def init_params(key):
    """torch.nn.Linear-style init (U[-1/sqrt(fan_in), 1/sqrt(fan_in)]);
    weights in torch (out, in) layout, biases as column vectors,
    fc3 weight stored as a (64, 1) column for the in-kernel reduce."""
    dims = [(D_IN, D_H1), (D_H1, D_H2), (D_H2, D_OUT)]
    params = {}
    for i, (fan_in, fan_out) in enumerate(dims, start=1):
        key, kw, kb = jax.random.split(key, 3)
        bound = 1.0 / np.sqrt(fan_in)
        params[f"w{i}"] = jax.random.uniform(
            kw, (fan_out, fan_in), jnp.float32, minval=-bound, maxval=bound)
        params[f"b{i}"] = jax.random.uniform(
            kb, (fan_out, 1), jnp.float32, minval=-bound, maxval=bound)
    params["w3"] = params["w3"].reshape(D_H2, D_OUT)   # (64, 1) column
    params["b3"] = params["b3"].reshape(1, 1)
    return params


def pgn_reference(x, params):
    h = jnp.maximum(x @ params["w1"].T + params["b1"].T, 0.0)
    h = jnp.maximum(h @ params["w2"].T + params["b2"].T, 0.0)
    return jax.nn.sigmoid(h @ params["w3"] + params["b3"])


if __name__ == "__main__":
    key = jax.random.PRNGKey(0)
    key, kx = jax.random.split(key)

    B = 8                                        # small batch of CartPole states
    x = jax.random.normal(kx, (B, D_IN), jnp.float32)
    params = init_params(key)

    out = jax.block_until_ready(pgn_forward(x, params))

    ref = pgn_reference(x, params)
    np.testing.assert_allclose(np.asarray(out), np.asarray(ref), rtol=1e-5, atol=1e-5)

    print("KERNEL_OK")
</pallas_src>

<mosaic_0001>
module attributes {stable_mosaic.version = 11 : i64} {
  func.func @_pgn_kernel(%arg0: i32, %arg1: memref<4x128xf32, #tpu.memory_space<vmem>>, %arg2: memref<24x4xf32, #tpu.memory_space<vmem>>, %arg3: memref<24x1xf32, #tpu.memory_space<vmem>>, %arg4: memref<64x24xf32, #tpu.memory_space<vmem>>, %arg5: memref<64x1xf32, #tpu.memory_space<vmem>>, %arg6: memref<64x1xf32, #tpu.memory_space<vmem>>, %arg7: memref<1x1xf32, #tpu.memory_space<vmem>>, %arg8: memref<1x128xf32, #tpu.memory_space<vmem>>) attributes {dimension_semantics = [#tpu.dimension_semantics<parallel>], iteration_bounds = array<i64: 1>, scalar_prefetch = 0 : i64, scratch_operands = 0 : i64, tpu.core_type = #tpu.core_type<tc>, window_params = [{transform_indices = @transform_0, window_bounds = array<i64: 4, 128>}, {pipeline_mode = #tpu.pipeline_mode<synchronous>, transform_indices = @transform_1, window_bounds = array<i64: 24, 4>}, {pipeline_mode = #tpu.pipeline_mode<synchronous>, transform_indices = @transform_2, window_bounds = array<i64: 24, 1>}, {pipeline_mode = #tpu.pipeline_mode<synchronous>, transform_indices = @transform_3, window_bounds = array<i64: 64, 24>}, {pipeline_mode = #tpu.pipeline_mode<synchronous>, transform_indices = @transform_4, window_bounds = array<i64: 64, 1>}, {pipeline_mode = #tpu.pipeline_mode<synchronous>, transform_indices = @transform_5, window_bounds = array<i64: 64, 1>}, {pipeline_mode = #tpu.pipeline_mode<synchronous>, transform_indices = @transform_6, window_bounds = array<i64: 1, 1>}, {transform_indices = @transform_7, window_bounds = array<i64: 1, 128>}]} {
    %c0 = arith.constant 0 : index
    %c0_0 = arith.constant 0 : index
    %0 = vector.load %arg1[%c0, %c0_0] : memref<4x128xf32, #tpu.memory_space<vmem>>, vector<4x128xf32>
    %c0_1 = arith.constant 0 : index
    %c0_2 = arith.constant 0 : index
    %1 = vector.load %arg2[%c0_1, %c0_2] : memref<24x4xf32, #tpu.memory_space<vmem>>, vector<24x4xf32>
    %cst = arith.constant dense<0.000000e+00> : vector<24x128xf32>
    %2 = tpu.matmul %1, %0, %cst {dimension_numbers = #tpu.dot_dimension_numbers<[1], [0], [0], [1], [0, 0, 1, 1], [], []>} : vector<24x4xf32>, vector<4x128xf32>, vector<24x128xf32> -> vector<24x128xf32>
    %c0_3 = arith.constant 0 : index
    %c0_4 = arith.constant 0 : index
    %3 = vector.load %arg3[%c0_3, %c0_4] : memref<24x1xf32, #tpu.memory_space<vmem>>, vector<24x1xf32>
    %4 = vector.broadcast %3 : vector<24x1xf32> to vector<24x128xf32>
    %5 = arith.addf %2, %4 : vector<24x128xf32>
    %cst_5 = arith.constant 0.000000e+00 : f32
    %6 = vector.broadcast %cst_5 : f32 to vector<24x128xf32>
    %7 = arith.maximumf %5, %6 : vector<24x128xf32>
    %c0_6 = arith.constant 0 : index
    %c0_7 = arith.constant 0 : index
    %8 = vector.load %arg4[%c0_6, %c0_7] : memref<64x24xf32, #tpu.memory_space<vmem>>, vector<64x24xf32>
    %cst_8 = arith.constant dense<0.000000e+00> : vector<64x128xf32>
    %9 = tpu.matmul %8, %7, %cst_8 {dimension_numbers = #tpu.dot_dimension_numbers<[1], [0], [0], [1], [0, 0, 1, 1], [], []>} : vector<64x24xf32>, vector<24x128xf32>, vector<64x128xf32> -> vector<64x128xf32>
    %c0_9 = arith.constant 0 : index
    %c0_10 = arith.constant 0 : index
    %10 = vector.load %arg5[%c0_9, %c0_10] : memref<64x1xf32, #tpu.memory_space<vmem>>, vector<64x1xf32>
    %11 = vector.broadcast %10 : vector<64x1xf32> to vector<64x128xf32>
    %12 = arith.addf %9, %11 : vector<64x128xf32>
    %cst_11 = arith.constant 0.000000e+00 : f32
    %13 = vector.broadcast %cst_11 : f32 to vector<64x128xf32>
    %14 = arith.maximumf %12, %13 : vector<64x128xf32>
    %c0_12 = arith.constant 0 : index
    %c0_13 = arith.constant 0 : index
    %15 = vector.load %arg6[%c0_12, %c0_13] : memref<64x1xf32, #tpu.memory_space<vmem>>, vector<64x1xf32>
    %16 = vector.broadcast %15 : vector<64x1xf32> to vector<64x128xf32>
    %17 = arith.mulf %14, %16 : vector<64x128xf32>
    %cst_14 = arith.constant dense<0.000000e+00> : vector<128xf32>
    %18 = vector.multi_reduction <add>, %17, %cst_14 [0] : vector<64x128xf32> to vector<128xf32>
    %19 = vector.shape_cast %18 : vector<128xf32> to vector<1x128xf32>
    %c0_15 = arith.constant 0 : index
    %c0_16 = arith.constant 0 : index
    %20 = vector.load %arg7[%c0_15, %c0_16] : memref<1x1xf32, #tpu.memory_space<vmem>>, vector<1x1xf32>
    %21 = vector.broadcast %20 : vector<1x1xf32> to vector<1x128xf32>
    %22 = arith.addf %19, %21 : vector<1x128xf32>
    %23 = arith.negf %22 : vector<1x128xf32>
    %24 = math.exp %23 : vector<1x128xf32>
    %cst_17 = arith.constant 1.000000e+00 : f32
    %25 = vector.broadcast %cst_17 : f32 to vector<1x128xf32>
    %26 = arith.addf %25, %24 : vector<1x128xf32>
    %27 = arith.divf %25, %26 : vector<1x128xf32>
    %c0_18 = arith.constant 0 : index
    %c0_19 = arith.constant 0 : index
    %28 = vector.load %arg8[%c0_18, %c0_19] : memref<1x128xf32, #tpu.memory_space<vmem>>, vector<1x128xf32>
    tpu.vector_store %arg8[%c0_18, %c0_19], %27 {strides = array<i32>} : memref<1x128xf32, #tpu.memory_space<vmem>>, vector<1x128xf32>,
    return
  }
  func.func @transform_0(%arg0: i32) -> (i32, i32) {
    %c0_i32 = arith.constant 0 : i32
    %c0_i32_0 = arith.constant 0 : i32
    return %c0_i32, %arg0 : i32, i32
  }
  func.func @transform_1(%arg0: i32) -> (i32, i32) {
    %c0_i32 = arith.constant 0 : i32
    %c0_i32_0 = arith.constant 0 : i32
    %c0_i32_1 = arith.constant 0 : i32
    return %c0_i32, %c0_i32_0 : i32, i32
  }
  func.func @transform_2(%arg0: i32) -> (i32, i32) {
    %c0_i32 = arith.constant 0 : i32
    %c0_i32_0 = arith.constant 0 : i32
    %c0_i32_1 = arith.constant 0 : i32
    return %c0_i32, %c0_i32_0 : i32, i32
  }
  func.func @transform_3(%arg0: i32) -> (i32, i32) {
    %c0_i32 = arith.constant 0 : i32
    %c0_i32_0 = arith.constant 0 : i32
    %c0_i32_1 = arith.constant 0 : i32
    return %c0_i32, %c0_i32_0 : i32, i32
  }
  func.func @transform_4(%arg0: i32) -> (i32, i32) {
    %c0_i32 = arith.constant 0 : i32
    %c0_i32_0 = arith.constant 0 : i32
    %c0_i32_1 = arith.constant 0 : i32
    return %c0_i32, %c0_i32_0 : i32, i32
  }
  func.func @transform_5(%arg0: i32) -> (i32, i32) {
    %c0_i32 = arith.constant 0 : i32
    %c0_i32_0 = arith.constant 0 : i32
    %c0_i32_1 = arith.constant 0 : i32
    return %c0_i32, %c0_i32_0 : i32, i32
  }
  func.func @transform_6(%arg0: i32) -> (i32, i32) {
    %c0_i32 = arith.constant 0 : i32
    %c0_i32_0 = arith.constant 0 : i32
    %c0_i32_1 = arith.constant 0 : i32
    return %c0_i32, %c0_i32_0 : i32, i32
  }
  func.func @transform_7(%arg0: i32) -> (i32, i32) {
    %c0_i32 = arith.constant 0 : i32
    %c0_i32_0 = arith.constant 0 : i32
    return %c0_i32, %arg0 : i32, i32
  }
}

</mosaic_0001>

<llo_original>
// kernel: tpu_custom_call.1
$region0: #{tpu_custom_call.1}
  #allocation0 [shape = 'u32[]', space=smem, size = 0x4, offset = 0x4, fixed_abs, tag = 'smem constant byte address 0x4 - core index']
  #allocation1 [shape = 'u32[144,128]{1,0:T(1,128)}', space=vmem, size = 0x12000, scoped, tag = 'internal scratch']
  #allocation2 [shape = 'f32[1,1]{1,0:T(1,128)S(1)}', space=vmem, size = 0x200, scoped, tag = 'scoped memory for tpu_custom_call.1']
  %s0 = inlined_call_operand.vmem [shape: f32[4,128], index: 0, kind: input, shape index: {}]
  %s1 = inlined_call_operand.vmem [shape: f32[24,4], index: 1, kind: input, shape index: {}]
  %s2 = inlined_call_operand.vmem [shape: f32[24,1], index: 2, kind: input, shape index: {}]
  %s3 = inlined_call_operand.vmem [shape: f32[64,24], index: 3, kind: input, shape index: {}]
  %s4 = inlined_call_operand.vmem [shape: f32[64,1], index: 4, kind: input, shape index: {}]
  %s5 = inlined_call_operand.vmem [shape: f32[64,1], index: 5, kind: input, shape index: {}]
  %s6 = inlined_call_operand.<no memory space> [shape: f32[1,1], index: 6, kind: input, shape index: {}]
  %s7 = inlined_call_operand.hbm [shape: f32[1,128], index: 7, kind: output, shape index: {}]
  %s8 = sld [smem:[#allocation0]]
  $region38: #{tpu_custom_call.1} parent=0
    _
  %s10 = ssub.s32 1, %s8
  %s11 = scalar_select 0, %s10, %s8
  %v12 = vstv %s6
  %13 = vst [vmem:[#allocation2] sm:$0x1] %v12
  $region1: #{tpu_custom_call.1} parent=0
    #allocation3 [shape = 'u8[512]{0}', space=vmem, size = 0x400, scoped, tag = 'output window, operand 0, single buffered']
    #allocation4 [shape = 's32[1]{0}', space=sflag, size = 0x4, scoped, tag = 'scoped memory for tpu_custom_call.1']
    %14 = vsyncpa [#allocation4], 0
    // Predicated region
    $region2: #{tpu_custom_call.1} parent=1 // pred_check
      _
    $region3: #{tpu_custom_call.1} parent=1 // pred_check_branch
      %16 = sbr.rel (0) target = $region5
    $region4: #{tpu_custom_call.1} parent=1 // pred_region
      _
    $region5: #{tpu_custom_call.1} parent=1 // pred_fallthru
      _
    // Predicated region
    $region6: #{tpu_custom_call.1} parent=1 // pred_check
      _
    $region7: #{tpu_custom_call.1} parent=1 // pred_check_branch
      %18 = sbr.rel (0) target = $region9
    $region8: #{tpu_custom_call.1} parent=1 // pred_region
      _
    $region9: #{tpu_custom_call.1} parent=1 // pred_fallthru
      _
    // Predicated region
    $region10: #{tpu_custom_call.1} parent=1 // pred_check
      _
    $region11: #{tpu_custom_call.1} parent=1 // pred_check_branch
      %20 = sbr.rel (0) target = $region13
    $region12: #{tpu_custom_call.1} parent=1 // pred_region
      _
    $region13: #{tpu_custom_call.1} parent=1 // pred_fallthru
      _
    // Predicated region
    $region14: #{tpu_custom_call.1} parent=1 // pred_check
      _
    $region15: #{tpu_custom_call.1} parent=1 // pred_check_branch
      %22 = sbr.rel (0) target = $region17
    $region16: #{tpu_custom_call.1} parent=1 // pred_region
      _
    $region17: #{tpu_custom_call.1} parent=1 // pred_fallthru
      _
    // Predicated region
    $region18: #{tpu_custom_call.1} parent=1 // pred_check
      _
    $region19: #{tpu_custom_call.1} parent=1 // pred_check_branch
      %24 = sbr.rel (0) target = $region21
    $region20: #{tpu_custom_call.1} parent=1 // pred_region
      _
    $region21: #{tpu_custom_call.1} parent=1 // pred_fallthru
      _
    // Predicated region
    $region22: #{tpu_custom_call.1} parent=1 // pred_check
      _
    $region23: #{tpu_custom_call.1} parent=1 // pred_check_branch
      %26 = sbr.rel (0) target = $region25
    $region24: #{tpu_custom_call.1} parent=1 // pred_region
      _
    $region25: #{tpu_custom_call.1} parent=1 // pred_fallthru
      _
    // Predicated region
    $region26: #{tpu_custom_call.1} parent=1 // pred_check
      _
    $region27: #{tpu_custom_call.1} parent=1 // pred_check_branch
      %28 = sbr.rel (0) target = $region29
    $region28: #{tpu_custom_call.1} parent=1 // pred_region
      _
    $region29: #{tpu_custom_call.1} parent=1 // pred_fallthru
      _
    %v29 = vld [vmem:[%s0] sm:$0xf]
    %v30 = vld [vmem:[%s1] sm:$0xff]
    %v31 = vld [vmem:[%s1 + $0x8] sm:$0xff]
    %v32 = vld [vmem:[%s1 + $0x10] sm:$0xff]
    %v33 = vld [vmem:[%s2] sm:$0xff]
    %v34 = vld [vmem:[%s2 + $0x8] sm:$0xff]
    %v35 = vld [vmem:[%s2 + $0x10] sm:$0xff]
    %37 = vset.pattern.permute.xlu0 0
    %38 = vperm.xlu0 %37, %v33
    %v39 = vpop.permute.xlu0 %38
    %42 = vset.pattern.permute.xlu0 0
    %43 = vperm.xlu0 %42, %v34
    %v44 = vpop.permute.xlu0 %43
    %47 = vset.pattern.permute.xlu0 0
    %48 = vperm.xlu0 %47, %v35
    %v49 = vpop.permute.xlu0 %48
    %vm51 = vcmask 31744
    %v53 = vsel %vm51, %v30, 0
    %v56 = vsel %vm51, %v31, 0
    %v59 = vsel %vm51, %v32, 0
    %vm61 = vcmask 1043456
    %v63 = vsel %vm61, %v29, 0
    %65 = vmatprep.subr.mxu0 0.0
    %66 = vmatpush1.msra.mxu0 0.0
    %67 = vmatprep.subr.mxu0 0.0
    %68 = vmatpush1.msra.mxu0 0.0
    %69 = vmatprep.subr.mxu0 0.0
    %70 = vmatpush1.msra.mxu0 0.0
    %71 = vmatprep.subr.mxu0 0.0
    %72 = vmatpush1.msra.mxu0 0.0
    %73 = vmatprep.subr.mxu0 0.0
    %74 = vmatpush1.msra.mxu0 0.0
    %75 = vmatprep.subr.mxu0 0.0
    %76 = vmatpush1.msra.mxu0 0.0
    %77 = vmatprep.subr.mxu0 0.0
    %78 = vmatpush1.msra.mxu0 0.0
    %79 = vmatprep.subr.mxu0 0.0
    %80 = vmatpush1.msra.mxu0 0.0
    %81 = vmatprep.subr.mxu0 0.0
    %82 = vmatpush1.msra.mxu0 0.0
    %83 = vmatprep.subr.mxu0 0.0
    %84 = vmatpush1.msra.mxu0 0.0
    %85 = vmatprep.subr.mxu0 0.0
    %86 = vmatpush1.msra.mxu0 0.0
    %87 = vmatprep.subr.mxu0 0.0
    %88 = vmatpush1.msra.mxu0 0.0
    %89 = vmatprep.subr.mxu0 0.0
    %90 = vmatpush1.msra.mxu0 0.0
    %91 = vmatprep.subr.mxu0 0.0
    %92 = vmatpush1.msra.mxu0 0.0
    %93 = vmatprep.subr.mxu0 0.0
    %94 = vmatpush1.msra.mxu0 0.0
    %95 = vmatprep.subr.mxu0 0.0
    %96 = vmatpush1.msra.mxu0 %v63
    %97 = vmatprep.subr.mxu0 0.0
    %98 = vmatpush2.msra.mxu0 0.0
    %99 = vmatprep.subr.mxu0 0.0
    %100 = vmatpush2.msra.mxu0 0.0
    %101 = vmatprep.subr.mxu0 0.0
    %102 = vmatpush2.msra.mxu0 0.0
    %103 = vmatprep.subr.mxu0 0.0
    %104 = vmatpush2.msra.mxu0 0.0
    %105 = vmatprep.subr.mxu0 0.0
    %106 = vmatpush2.msra.mxu0 0.0
    %107 = vmatprep.subr.mxu0 0.0
    %108 = vmatpush2.msra.mxu0 0.0
    %109 = vmatprep.subr.mxu0 0.0
    %110 = vmatpush2.msra.mxu0 0.0
    %111 = vmatprep.subr.mxu0 0.0
    %112 = vmatpush2.msra.mxu0 0.0
    %113 = vmatprep.subr.mxu0 0.0
    %114 = vmatpush2.msra.mxu0 0.0
    %115 = vmatprep.subr.mxu0 0.0
    %116 = vmatpush2.msra.mxu0 0.0
    %117 = vmatprep.subr.mxu0 0.0
    %118 = vmatpush2.msra.mxu0 0.0
    %119 = vmatprep.subr.mxu0 0.0
    %120 = vmatpush2.msra.mxu0 0.0
    %121 = vmatprep.subr.mxu0 0.0
    %122 = vmatpush2.msra.mxu0 0.0
    %123 = vmatprep.subr.mxu0 0.0
    %124 = vmatpush2.msra.mxu0 0.0
    %125 = vmatprep.subr.mxu0 0.0
    %126 = vmatpush2.msra.mxu0 0.0
    %127 = vmatprep.subr.mxu0 0.0
    %128 = vmatpush2.msra.mxu0 0.0
    %129 = vmatprep.mubr.f32.mxu0 0.0
    %130 = vmatmul.mubr.f32.gmra.mxu0 %v53
    %v131 = vpop.f32.mrf.mxu0
    %v132 = vadd.f32 %v39, %v131
    %v133 = vpop.f32.mrf.mxu0
    %134 = vmatprep.mubr.f32.mxu0 0.0
    %135 = vmatmul.mubr.f32.gmra.mxu0 %v56
    %v136 = vpop.f32.mrf.mxu0
    %v137 = vadd.f32 %v44, %v136
    %v138 = vpop.f32.mrf.mxu0
    %139 = vmatprep.mubr.f32.mxu0 0.0
    %140 = vmatmul.mubr.f32.gmra.mxu0 %v59
    %v141 = vpop.f32.mrf.mxu0
    %v142 = vadd.f32 %v49, %v141
    %v143 = vpop.f32.mrf.mxu0
    %144 = vdwg.mxu0
    %v145 = vmax.f32 %v132, 0.0
    %v146 = vmax.f32 %v137, 0.0
    %v147 = vmax.f32 %v142, 0.0
    %v148 = vld [vmem:[%s3] sm:$0xff]
    %v149 = vld [vmem:[%s3 + $0x8] sm:$0xff]
    %v150 = vld [vmem:[%s3 + $0x10] sm:$0xff]
    %v151 = vld [vmem:[%s3 + $0x18] sm:$0xff]
    %v152 = vld [vmem:[%s3 + $0x20] sm:$0xff]
    %v153 = vld [vmem:[%s3 + $0x28] sm:$0xff]
    %v154 = vld [vmem:[%s3 + $0x30] sm:$0xff]
    %v155 = vld [vmem:[%s3 + $0x38] sm:$0xff]
    %v156 = vld [vmem:[%s4] sm:$0xff]
    %v157 = vld [vmem:[%s4 + $0x8] sm:$0xff]
    %v158 = vld [vmem:[%s4 + $0x10] sm:$0xff]
    %v159 = vld [vmem:[%s4 + $0x18] sm:$0xff]
    %v160 = vld [vmem:[%s4 + $0x20] sm:$0xff]
    %v161 = vld [vmem:[%s4 + $0x28] sm:$0xff]
    %v162 = vld [vmem:[%s4 + $0x30] sm:$0xff]
    %v163 = vld [vmem:[%s4 + $0x38] sm:$0xff]
    %165 = vset.pattern.permute.xlu0 0
    %166 = vperm.xlu0 %165, %v156
    %v167 = vpop.permute.xlu0 %166
    %170 = vset.pattern.permute.xlu0 0
    %171 = vperm.xlu0 %170, %v157
    %v172 = vpop.permute.xlu0 %171
    %175 = vset.pattern.permute.xlu0 0
    %176 = vperm.xlu0 %175, %v158
    %v177 = vpop.permute.xlu0 %176
    %180 = vset.pattern.permute.xlu0 0
    %181 = vperm.xlu0 %180, %v159
    %v182 = vpop.permute.xlu0 %181
    %185 = vset.pattern.permute.xlu0 0
    %186 = vperm.xlu0 %185, %v160
    %v187 = vpop.permute.xlu0 %186
    %190 = vset.pattern.permute.xlu0 0
    %191 = vperm.xlu0 %190, %v161
    %v192 = vpop.permute.xlu0 %191
    %195 = vset.pattern.permute.xlu0 0
    %196 = vperm.xlu0 %195, %v162
    %v197 = vpop.permute.xlu0 %196
    %200 = vset.pattern.permute.xlu0 0
    %201 = vperm.xlu0 %200, %v163
    %v202 = vpop.permute.xlu0 %201
    %vm204 = vcmask 195584
    %v206 = vsel %vm204, %v148, 0
    %v209 = vsel %vm204, %v149, 0
    %v212 = vsel %vm204, %v150, 0
    %v215 = vsel %vm204, %v151, 0
    %v218 = vsel %vm204, %v152, 0
    %v221 = vsel %vm204, %v153, 0
    %v224 = vsel %vm204, %v154, 0
    %v227 = vsel %vm204, %v155, 0
    %229 = vmatprep.subr.mxu0 0.0
    %230 = vmatpush1.msra.mxu0 0.0
    %231 = vmatprep.subr.mxu0 0.0
    %232 = vmatpush1.msra.mxu0 0.0
    %233 = vmatprep.subr.mxu0 0.0
    %234 = vmatpush1.msra.mxu0 0.0
    %235 = vmatprep.subr.mxu0 0.0
    %236 = vmatpush1.msra.mxu0 0.0
    %237 = vmatprep.subr.mxu0 0.0
    %238 = vmatpush1.msra.mxu0 0.0
    %239 = vmatprep.subr.mxu0 0.0
    %240 = vmatpush1.msra.mxu0 0.0
    %241 = vmatprep.subr.mxu0 0.0
    %242 = vmatpush1.msra.mxu0 0.0
    %243 = vmatprep.subr.mxu0 0.0
    %244 = vmatpush1.msra.mxu0 0.0
    %245 = vmatprep.subr.mxu0 0.0
    %246 = vmatpush1.msra.mxu0 0.0
    %247 = vmatprep.subr.mxu0 0.0
    %248 = vmatpush1.msra.mxu0 0.0
    %249 = vmatprep.subr.mxu0 0.0
    %250 = vmatpush1.msra.mxu0 0.0
    %251 = vmatprep.subr.mxu0 0.0
    %252 = vmatpush1.msra.mxu0 0.0
    %253 = vmatprep.subr.mxu0 0.0
    %254 = vmatpush1.msra.mxu0 0.0
    %255 = vmatprep.subr.mxu0 0.0
    %256 = vmatpush1.msra.mxu0 %v147
    %257 = vmatprep.subr.mxu0 0.0
    %258 = vmatpush1.msra.mxu0 %v146
    %259 = vmatprep.subr.mxu0 0.0
    %260 = vmatpush1.msra.mxu0 %v145
    %261 = vmatprep.subr.mxu0 0.0
    %262 = vmatpush2.msra.mxu0 0.0
    %263 = vmatprep.subr.mxu0 0.0
    %264 = vmatpush2.msra.mxu0 0.0
    %265 = vmatprep.subr.mxu0 0.0
    %266 = vmatpush2.msra.mxu0 0.0
    %267 = vmatprep.subr.mxu0 0.0
    %268 = vmatpush2.msra.mxu0 0.0
    %269 = vmatprep.subr.mxu0 0.0
    %270 = vmatpush2.msra.mxu0 0.0
    %271 = vmatprep.subr.mxu0 0.0
    %272 = vmatpush2.msra.mxu0 0.0
    %273 = vmatprep.subr.mxu0 0.0
    %274 = vmatpush2.msra.mxu0 0.0
    %275 = vmatprep.subr.mxu0 0.0
    %276 = vmatpush2.msra.mxu0 0.0
    %277 = vmatprep.subr.mxu0 0.0
    %278 = vmatpush2.msra.mxu0 0.0
    %279 = vmatprep.subr.mxu0 0.0
    %280 = vmatpush2.msra.mxu0 0.0
    %281 = vmatprep.subr.mxu0 0.0
    %282 = vmatpush2.msra.mxu0 0.0
    %283 = vmatprep.subr.mxu0 0.0
    %284 = vmatpush2.msra.mxu0 0.0
    %285 = vmatprep.subr.mxu0 0.0
    %286 = vmatpush2.msra.mxu0 0.0
    %287 = vmatprep.subr.mxu0 0.0
    %288 = vmatpush2.msra.mxu0 0.0
    %289 = vmatprep.subr.mxu0 0.0
    %290 = vmatpush2.msra.mxu0 0.0
    %291 = vmatprep.subr.mxu0 0.0
    %292 = vmatpush2.msra.mxu0 0.0
    %293 = vmatprep.mubr.f32.mxu0 0.0
    %294 = vmatmul.mubr.f32.gmra.mxu0 %v206
    %v295 = vpop.f32.mrf.mxu0
    %v296 = vadd.f32 %v167, %v295
    %v297 = vpop.f32.mrf.mxu0
    %298 = vmatprep.mubr.f32.mxu0 0.0
    %299 = vmatmul.mubr.f32.gmra.mxu0 %v209
    %v300 = vpop.f32.mrf.mxu0
    %v301 = vadd.f32 %v172, %v300
    %v302 = vpop.f32.mrf.mxu0
    %303 = vmatprep.mubr.f32.mxu0 0.0
    %304 = vmatmul.mubr.f32.gmra.mxu0 %v212
    %v305 = vpop.f32.mrf.mxu0
    %v306 = vadd.f32 %v177, %v305
    %v307 = vpop.f32.mrf.mxu0
    %308 = vmatprep.mubr.f32.mxu0 0.0
    %309 = vmatmul.mubr.f32.gmra.mxu0 %v215
    %v310 = vpop.f32.mrf.mxu0
    %v311 = vadd.f32 %v182, %v310
    %v312 = vpop.f32.mrf.mxu0
    %313 = vmatprep.mubr.f32.mxu0 0.0
    %314 = vmatmul.mubr.f32.gmra.mxu0 %v218
    %v315 = vpop.f32.mrf.mxu0
    %v316 = vadd.f32 %v187, %v315
    %v317 = vpop.f32.mrf.mxu0
    %318 = vmatprep.mubr.f32.mxu0 0.0
    %319 = vmatmul.mubr.f32.gmra.mxu0 %v221
    %v320 = vpop.f32.mrf.mxu0
    %v321 = vadd.f32 %v192, %v320
    %v322 = vpop.f32.mrf.mxu0
    %323 = vmatprep.mubr.f32.mxu0 0.0
    %324 = vmatmul.mubr.f32.gmra.mxu0 %v224
    %v325 = vpop.f32.mrf.mxu0
    %v326 = vadd.f32 %v197, %v325
    %v327 = vpop.f32.mrf.mxu0
    %328 = vmatprep.mubr.f32.mxu0 0.0
    %329 = vmatmul.mubr.f32.gmra.mxu0 %v227
    %v330 = vpop.f32.mrf.mxu0
    %v331 = vadd.f32 %v202, %v330
    %v332 = vpop.f32.mrf.mxu0
    %333 = vdwg.mxu0
    %v334 = vmax.f32 %v296, 0.0
    %v335 = vmax.f32 %v301, 0.0
    %v336 = vmax.f32 %v306, 0.0
    %v337 = vmax.f32 %v311, 0.0
    %v338 = vmax.f32 %v316, 0.0
    %v339 = vmax.f32 %v321, 0.0
    %v340 = vmax.f32 %v326, 0.0
    %v341 = vmax.f32 %v331, 0.0
    %v342 = vld [vmem:[%s5] sm:$0xff]
    %v343 = vld [vmem:[%s5 + $0x8] sm:$0xff]
    %v344 = vld [vmem:[%s5 + $0x10] sm:$0xff]
    %v345 = vld [vmem:[%s5 + $0x18] sm:$0xff]
    %v346 = vld [vmem:[%s5 + $0x20] sm:$0xff]
    %v347 = vld [vmem:[%s5 + $0x28] sm:$0xff]
    %v348 = vld [vmem:[%s5 + $0x30] sm:$0xff]
    %v349 = vld [vmem:[%s5 + $0x38] sm:$0xff]
    %351 = vset.pattern.permute.xlu0 0
    %352 = vperm.xlu0 %351, %v342
    %v353 = vpop.permute.xlu0 %352
    %356 = vset.pattern.permute.xlu0 0
    %357 = vperm.xlu0 %356, %v343
    %v358 = vpop.permute.xlu0 %357
    %361 = vset.pattern.permute.xlu0 0
    %362 = vperm.xlu0 %361, %v344
    %v363 = vpop.permute.xlu0 %362
    %366 = vset.pattern.permute.xlu0 0
    %367 = vperm.xlu0 %366, %v345
    %v368 = vpop.permute.xlu0 %367
    %371 = vset.pattern.permute.xlu0 0
    %372 = vperm.xlu0 %371, %v346
    %v373 = vpop.permute.xlu0 %372
    %376 = vset.pattern.permute.xlu0 0
    %377 = vperm.xlu0 %376, %v347
    %v378 = vpop.permute.xlu0 %377
    %381 = vset.pattern.permute.xlu0 0
    %382 = vperm.xlu0 %381, %v348
    %v383 = vpop.permute.xlu0 %382
    %386 = vset.pattern.permute.xlu0 0
    %387 = vperm.xlu0 %386, %v349
    %v388 = vpop.permute.xlu0 %387
    %v390 = vmul.f32 %v334, %v353
    %v391 = vmul.f32 %v335, %v358
    %v392 = vmul.f32 %v336, %v363
    %v393 = vmul.f32 %v337, %v368
    %v394 = vmul.f32 %v338, %v373
    %v395 = vmul.f32 %v339, %v378
    %v396 = vmul.f32 %v340, %v383
    %v397 = vmul.f32 %v341, %v388
    %v398 = vadd.f32 %v390, %v391
    %v399 = vadd.f32 %v398, %v392
    %v400 = vadd.f32 %v399, %v393
    %v401 = vadd.f32 %v400, %v394
    %v402 = vadd.f32 %v401, %v395
    %v403 = vadd.f32 %v402, %v396
    %v404 = vadd.f32 %v403, %v397
    %v405 = vrot.slane %v404, 4
    %v406 = vadd.f32 %v404, %v405
    %v407 = vrot.slane %v406, 2
    %v408 = vadd.f32 %v406, %v407
    %v409 = vrot.slane %v408, 1
    %v410 = vadd.f32 %v408, %v409
    %v411 = vld [vmem:[#allocation2] sm:$0x1]
    %413 = vset.pattern.permute.xlu0 0
    %414 = vperm.xlu0 %413, %v411
    %v415 = vpop.permute.xlu0 %414
    %v417 = vlaneseq
    %v418 = vshrl.u32 %v417, 7
    %v419 = vsub.s32 0, %v418
    %v420 = vrot.slane %v415, %v419
    %v421 = vadd.f32 %v410, %v420
    %v422 = vxor.u32 %v421, 2147483648
    %v423 = vmul.f32 %v422, 1.442695
    %v424 = vpow.pop %v423
    %v425 = vadd.f32 %v424, 1.0
    %v426 = vrcp.pop %v425
    %v427 = vmul.f32 1.0, %v426
    %428 = vst [vmem:[#allocation3] sm:$0x1] %v427
    // Predicated region
    $region30: #{tpu_custom_call.1} parent=1 // pred_check
      _
    $region31: #{tpu_custom_call.1} parent=1 // pred_check_branch
      %430 = sbr.rel (0) target = $region33
    $region32: #{tpu_custom_call.1} parent=1 // pred_region
      %s432 = ssub.s32 16, 16
      %433 = vsyncadd [#allocation4], %s432
      %s435 = sshll.u32 [#allocation3], 4
      %s436 = int_to_ptr.vmem [resolvable:$true] %s435
      %438 = dma.vmem_to_hbm [thread:$0]  %s436, 16, %s7, [#allocation4]
    $region33: #{tpu_custom_call.1} parent=1 // pred_fallthru
      _
    // Predicated region
    $region34: #{tpu_custom_call.1} parent=1 // pred_check
      _
    $region35: #{tpu_custom_call.1} parent=1 // pred_check_branch
      %440 = sbr.rel (0) target = $region37
    $region36: #{tpu_custom_call.1} parent=1 // pred_region
      %441 = dma.done [#allocation4], 16
    $region37: #{tpu_custom_call.1} parent=1 // pred_fallthru
      _
    %442 = vsyncpa [#allocation4], 1

</llo_original>
